<compile_context>
chip_gen: v7x
topology: tpu7x:2x2x1
jax: 0.10.0
libtpu: 0.0.40
codegen_flags: <defaults>
</compile_context>

<pallas_src>
import jax
import jax.numpy as jnp
from jax import lax
from jax.experimental import pallas as pl
from jax.experimental.pallas import tpu as pltpu

_LANES = 128
_SUBLANES = 8
_MAX_TILE_ROWS = 4096   # 4096 * 128 * 4B = 2 MiB per f32 input block
_N_CORE_SPLIT = 2       # leading "parallel" grid axis -> both TCs on v7x


def _round_up(x, m):
    return -(-x // m) * m


def _make_kernel(drop_rate, smooth, n_total, tile_rows, steps_per_split):
    def kernel(pred_ref, label_ref, num_ref, w_ref):
        c = pl.program_id(0)   # core-split index
        s = pl.program_id(1)   # step within this split (reduction axis)

        @pl.when(s == 0)
        def _init():
            num_ref[...] = jnp.zeros_like(num_ref)
            w_ref[...] = jnp.zeros_like(w_ref)

        pred = pred_ref[...].astype(jnp.float32)     # (tile_rows, 128)
        label = label_ref[...].astype(jnp.float32)

        # Tail / phantom-block mask from the *logical* (unclamped) block index.
        row_start = (c * steps_per_split + s) * tile_rows
        row_ids = row_start + lax.broadcasted_iota(jnp.int32, (tile_rows, _LANES), 0)
        lane_ids = lax.broadcasted_iota(jnp.int32, (tile_rows, _LANES), 1)
        valid = (row_ids * _LANES + lane_ids) < n_total

        l1 = jnp.abs(label - pred)
        keep = jnp.logical_and(l1 > jnp.float32(drop_rate), valid)
        contrib = jnp.where(keep, label * jnp.log(pred + jnp.float32(smooth)),
                            jnp.float32(0.0))
        w = jnp.where(keep, jnp.float32(1.0), jnp.float32(0.0))

        # Fold (tile_rows,128) -> (8,128) vector partials (free reshape,
        # vreg-wise adds); accumulate into the resident output block.
        num_ref[...] += contrib.reshape(tile_rows // _SUBLANES, _SUBLANES, _LANES
                                        ).sum(axis=0).reshape(1, _SUBLANES, _LANES)
        w_ref[...] += w.reshape(tile_rows // _SUBLANES, _SUBLANES, _LANES
                                ).sum(axis=0).reshape(1, _SUBLANES, _LANES)

    return kernel


def drop_output_loss(predict, label, drop_rate=0.1):
    smooth = 1e-06
    p = predict.reshape(-1)
    t = label.reshape(-1)
    if not jnp.issubdtype(p.dtype, jnp.floating):
        p = p.astype(jnp.float32)
    if not jnp.issubdtype(t.dtype, jnp.floating):
        t = t.astype(jnp.float32)

    n_total = p.shape[0]
    rows = -(-n_total // _LANES)
    n_lane_pad = rows * _LANES
    if n_lane_pad != n_total:
        # Only when n is not lane-aligned; the fill value is irrelevant since
        # the tail is masked in-kernel.
        p = jnp.pad(p, (0, n_lane_pad - n_total))
        t = jnp.pad(t, (0, n_lane_pad - n_total))
    p2 = p.reshape(rows, _LANES)
    t2 = t.reshape(rows, _LANES)

    rows_per_split = -(-rows // _N_CORE_SPLIT)
    tile_rows = min(_MAX_TILE_ROWS, _round_up(rows_per_split, _SUBLANES))
    steps_per_split = -(-rows_per_split // tile_rows)
    n_blocks = -(-rows // tile_rows)
    grid = (_N_CORE_SPLIT, steps_per_split)

    def in_map(c, s):
        # Clamp phantom trailing blocks (odd block counts); they are fully
        # masked in-kernel via the logical index, so re-reading the last real
        # block is harmless.
        return (jnp.minimum(c * steps_per_split + s, n_blocks - 1), 0)

    out_map = lambda c, s: (c, 0, 0)

    kernel = _make_kernel(float(drop_rate), smooth, n_total, tile_rows,
                          steps_per_split)

    bytes_in = p2.size * p2.dtype.itemsize + t2.size * t2.dtype.itemsize
    num_part, w_part = pl.pallas_call(
        kernel,
        out_shape=(
            jax.ShapeDtypeStruct((_N_CORE_SPLIT, _SUBLANES, _LANES), jnp.float32),
            jax.ShapeDtypeStruct((_N_CORE_SPLIT, _SUBLANES, _LANES), jnp.float32),
        ),
        grid=grid,
        in_specs=[
            pl.BlockSpec((tile_rows, _LANES), in_map),
            pl.BlockSpec((tile_rows, _LANES), in_map),
        ],
        out_specs=(
            pl.BlockSpec((1, _SUBLANES, _LANES), out_map),
            pl.BlockSpec((1, _SUBLANES, _LANES), out_map),
        ),
        compiler_params=pltpu.CompilerParams(
            dimension_semantics=("parallel", "arbitrary")),
        cost_estimate=pl.CostEstimate(
            flops=8 * n_lane_pad,
            transcendentals=n_lane_pad,
            bytes_accessed=bytes_in + 2 * _N_CORE_SPLIT * _SUBLANES * _LANES * 4),
    )(p2, t2)

    num_total = jnp.sum(num_part)
    w_total = jnp.sum(w_part)
    # sum(w + smooth) over the ORIGINAL N elements == sum(w) + N * smooth
    return -num_total / (w_total + jnp.float32(float(n_total) * smooth))


def _reference(predict, label, drop_rate=0.1):
    smooth = 1e-06
    l1 = jnp.abs(label - predict)
    w = jnp.where(l1 > drop_rate, jnp.ones_like(predict), jnp.zeros_like(predict))
    w = jnp.where(w > 0, jnp.ones_like(predict), jnp.zeros_like(predict))
    return -jnp.sum(w * label * jnp.log(predict + smooth)) / jnp.sum(w + smooth)


if __name__ == "__main__":
    key = jax.random.PRNGKey(0)
    k1, k2 = jax.random.split(key)
    shape = (2, 4, 16, 16)   # batch=2, channels=4, spatial=16x16 -> 2048 elements
    predict = jax.random.uniform(k1, shape, dtype=jnp.float32)           # preds in (0,1)
    label = (jax.random.uniform(k2, shape) > 0.5).astype(jnp.float32)    # binary labels

    loss = drop_output_loss(predict, label)
    jax.block_until_ready(loss)

    ref = _reference(predict, label)
    assert jnp.allclose(loss, ref, atol=1e-4, rtol=1e-4), (loss, ref)
    print("KERNEL_OK")
</pallas_src>

<mosaic_0001>
module attributes {stable_mosaic.version = 11 : i64} {
  func.func @kernel(%arg0: i32, %arg1: i32, %arg2: memref<8x128xf32, #tpu.memory_space<vmem>>, %arg3: memref<8x128xf32, #tpu.memory_space<vmem>>, %arg4: memref<1x8x128xf32, #tpu.memory_space<vmem>>, %arg5: memref<1x8x128xf32, #tpu.memory_space<vmem>>) attributes {dimension_semantics = [#tpu.dimension_semantics<parallel>, #tpu.dimension_semantics<arbitrary>], iteration_bounds = array<i64: 2, 1>, scalar_prefetch = 0 : i64, scratch_operands = 0 : i64, tpu.core_type = #tpu.core_type<tc>, window_params = [{transform_indices = @transform_0, window_bounds = array<i64: 8, 128>}, {transform_indices = @transform_1, window_bounds = array<i64: 8, 128>}, {transform_indices = @transform_2, window_bounds = array<i64: 1, 8, 128>}, {transform_indices = @transform_3, window_bounds = array<i64: 1, 8, 128>}]} {
    %c0_i32 = arith.constant 0 : i32
    %0 = arith.cmpi eq, %arg1, %c0_i32 : i32
    %1 = arith.extui %0 : i1 to i32
    %c0_i32_0 = arith.constant 0 : i32
    %2 = arith.cmpi ne, %1, %c0_i32_0 : i32
    scf.if %2 {
      %cst_22 = arith.constant 0.000000e+00 : f32
      %43 = vector.broadcast %cst_22 : f32 to vector<1x8x128xf32>
      %c0_23 = arith.constant 0 : index
      %c0_24 = arith.constant 0 : index
      %c0_25 = arith.constant 0 : index
      %44 = vector.load %arg4[%c0_23, %c0_24, %c0_25] : memref<1x8x128xf32, #tpu.memory_space<vmem>>, vector<1x8x128xf32>
      tpu.vector_store %arg4[%c0_23, %c0_24, %c0_25], %43 {strides = array<i32>} : memref<1x8x128xf32, #tpu.memory_space<vmem>>, vector<1x8x128xf32>,
      %cst_26 = arith.constant 0.000000e+00 : f32
      %45 = vector.broadcast %cst_26 : f32 to vector<1x8x128xf32>
      %c0_27 = arith.constant 0 : index
      %c0_28 = arith.constant 0 : index
      %c0_29 = arith.constant 0 : index
      %46 = vector.load %arg5[%c0_27, %c0_28, %c0_29] : memref<1x8x128xf32, #tpu.memory_space<vmem>>, vector<1x8x128xf32>
      tpu.vector_store %arg5[%c0_27, %c0_28, %c0_29], %45 {strides = array<i32>} : memref<1x8x128xf32, #tpu.memory_space<vmem>>, vector<1x8x128xf32>,
    } else {
    }
    %c0 = arith.constant 0 : index
    %c0_1 = arith.constant 0 : index
    %3 = vector.load %arg2[%c0, %c0_1] : memref<8x128xf32, #tpu.memory_space<vmem>>, vector<8x128xf32>
    %c0_2 = arith.constant 0 : index
    %c0_3 = arith.constant 0 : index
    %4 = vector.load %arg3[%c0_2, %c0_3] : memref<8x128xf32, #tpu.memory_space<vmem>>, vector<8x128xf32>
    %c1_i32 = arith.constant 1 : i32
    %5 = arith.muli %arg0, %c1_i32 : i32
    %6 = arith.addi %5, %arg1 : i32
    %c8_i32 = arith.constant 8 : i32
    %7 = arith.muli %6, %c8_i32 : i32
    %8 = tpu.iota {dimensions = array<i32: 0>} : vector<8x128xi32>
    %9 = vector.broadcast %7 : i32 to vector<8x128xi32>
    %10 = arith.addi %9, %8 : vector<8x128xi32>
    %11 = tpu.iota {dimensions = array<i32: 1>} : vector<8x128xi32>
    %c128_i32 = arith.constant 128 : i32
    %12 = vector.broadcast %c128_i32 : i32 to vector<8x128xi32>
    %13 = arith.muli %10, %12 : vector<8x128xi32>
    %14 = arith.addi %13, %11 : vector<8x128xi32>
    %c2048_i32 = arith.constant 2048 : i32
    %15 = vector.broadcast %c2048_i32 : i32 to vector<8x128xi32>
    %16 = arith.cmpi slt, %14, %15 : vector<8x128xi32>
    %17 = arith.subf %4, %3 : vector<8x128xf32>
    %18 = math.absf %17 : vector<8x128xf32>
    %cst = arith.constant 1.000000e-01 : f32
    %19 = vector.broadcast %cst : f32 to vector<8x128xf32>
    %20 = arith.cmpf ogt, %18, %19 : vector<8x128xf32>
    %21 = arith.andi %20, %16 : vector<8x128xi1>
    %cst_4 = arith.constant 9.99999997E-7 : f32
    %22 = vector.broadcast %cst_4 : f32 to vector<8x128xf32>
    %23 = arith.addf %3, %22 : vector<8x128xf32>
    %24 = math.log %23 : vector<8x128xf32>
    %25 = arith.mulf %4, %24 : vector<8x128xf32>
    %cst_5 = arith.constant 0.000000e+00 : f32
    %26 = vector.broadcast %cst_5 : f32 to vector<8x128xf32>
    %27 = arith.select %21, %25, %26 : vector<8x128xi1>, vector<8x128xf32>
    %cst_6 = arith.constant 1.000000e+00 : f32
    %cst_7 = arith.constant 0.000000e+00 : f32
    %28 = vector.broadcast %cst_6 : f32 to vector<8x128xf32>
    %29 = vector.broadcast %cst_7 : f32 to vector<8x128xf32>
    %30 = arith.select %21, %28, %29 : vector<8x128xi1>, vector<8x128xf32>
    %c0_8 = arith.constant 0 : index
    %c0_9 = arith.constant 0 : index
    %c0_10 = arith.constant 0 : index
    %31 = vector.load %arg4[%c0_8, %c0_9, %c0_10] : memref<1x8x128xf32, #tpu.memory_space<vmem>>, vector<1x8x128xf32>
    %32 = vector.shape_cast %27 : vector<8x128xf32> to vector<1x8x128xf32>
    %cst_11 = arith.constant dense<0.000000e+00> : vector<8x128xf32>
    %33 = vector.multi_reduction <add>, %32, %cst_11 [0] : vector<1x8x128xf32> to vector<8x128xf32>
    %34 = vector.shape_cast %33 : vector<8x128xf32> to vector<1x8x128xf32>
    %35 = arith.addf %31, %34 : vector<1x8x128xf32>
    %c0_12 = arith.constant 0 : index
    %c0_13 = arith.constant 0 : index
    %c0_14 = arith.constant 0 : index
    %36 = vector.load %arg4[%c0_12, %c0_13, %c0_14] : memref<1x8x128xf32, #tpu.memory_space<vmem>>, vector<1x8x128xf32>
    tpu.vector_store %arg4[%c0_12, %c0_13, %c0_14], %35 {strides = array<i32>} : memref<1x8x128xf32, #tpu.memory_space<vmem>>, vector<1x8x128xf32>,
    %c0_15 = arith.constant 0 : index
    %c0_16 = arith.constant 0 : index
    %c0_17 = arith.constant 0 : index
    %37 = vector.load %arg5[%c0_15, %c0_16, %c0_17] : memref<1x8x128xf32, #tpu.memory_space<vmem>>, vector<1x8x128xf32>
    %38 = vector.shape_cast %30 : vector<8x128xf32> to vector<1x8x128xf32>
    %cst_18 = arith.constant dense<0.000000e+00> : vector<8x128xf32>
    %39 = vector.multi_reduction <add>, %38, %cst_18 [0] : vector<1x8x128xf32> to vector<8x128xf32>
    %40 = vector.shape_cast %39 : vector<8x128xf32> to vector<1x8x128xf32>
    %41 = arith.addf %37, %40 : vector<1x8x128xf32>
    %c0_19 = arith.constant 0 : index
    %c0_20 = arith.constant 0 : index
    %c0_21 = arith.constant 0 : index
    %42 = vector.load %arg5[%c0_19, %c0_20, %c0_21] : memref<1x8x128xf32, #tpu.memory_space<vmem>>, vector<1x8x128xf32>
    tpu.vector_store %arg5[%c0_19, %c0_20, %c0_21], %41 {strides = array<i32>} : memref<1x8x128xf32, #tpu.memory_space<vmem>>, vector<1x8x128xf32>,
    return
  }
  func.func @transform_0(%arg0: i32, %arg1: i32) -> (i32, i32) {
    %c1_i32 = arith.constant 1 : i32
    %0 = arith.muli %arg0, %c1_i32 : i32
    %1 = arith.addi %0, %arg1 : i32
    %c1_i32_0 = arith.constant 1 : i32
    %2 = arith.minsi %1, %c1_i32_0 : i32
    %c0_i32 = arith.constant 0 : i32
    %c0_i32_1 = arith.constant 0 : i32
    return %2, %c0_i32 : i32, i32
  }
  func.func @transform_1(%arg0: i32, %arg1: i32) -> (i32, i32) {
    %c1_i32 = arith.constant 1 : i32
    %0 = arith.muli %arg0, %c1_i32 : i32
    %1 = arith.addi %0, %arg1 : i32
    %c1_i32_0 = arith.constant 1 : i32
    %2 = arith.minsi %1, %c1_i32_0 : i32
    %c0_i32 = arith.constant 0 : i32
    %c0_i32_1 = arith.constant 0 : i32
    return %2, %c0_i32 : i32, i32
  }
  func.func @transform_2(%arg0: i32, %arg1: i32) -> (i32, i32, i32) {
    %c0_i32 = arith.constant 0 : i32
    %c0_i32_0 = arith.constant 0 : i32
    %c0_i32_1 = arith.constant 0 : i32
    return %arg0, %c0_i32, %c0_i32_0 : i32, i32, i32
  }
  func.func @transform_3(%arg0: i32, %arg1: i32) -> (i32, i32, i32) {
    %c0_i32 = arith.constant 0 : i32
    %c0_i32_0 = arith.constant 0 : i32
    %c0_i32_1 = arith.constant 0 : i32
    return %arg0, %c0_i32, %c0_i32_0 : i32, i32, i32
  }
}

</mosaic_0001>

<llo_original>
// kernel: tpu_custom_call.1
$region0: #{tpu_custom_call.1}
  #allocation0 [shape = 'u32[]', space=smem, size = 0x4, offset = 0x4, fixed_abs, tag = 'smem constant byte address 0x4 - core index']
  #allocation1 [shape = 'u32[144,128]{1,0:T(1,128)}', space=vmem, size = 0x12000, scoped, tag = 'internal scratch']
  %s0 = inlined_call_operand.hbm [shape: f32[16,128], index: 0, kind: input, shape index: {}]
  %s1 = inlined_call_operand.hbm [shape: f32[16,128], index: 1, kind: input, shape index: {}]
  %s2 = inlined_call_operand.hbm [shape: f32[2,8,128], index: 2, kind: output, shape index: {0}]
  %s3 = inlined_call_operand.hbm [shape: f32[2,8,128], index: 3, kind: output, shape index: {1}]
  %4 = xla_tuple %s2, %s3
  %s5 = sld [smem:[#allocation0]]
  $region61: #{tpu_custom_call.1} parent=0
    _
  %s7 = ssub.s32 1, %s5
  %s8 = scalar_select 0, %s7, %s5
  $region1: #{tpu_custom_call.1} parent=0
    #allocation2 [shape = 'u8[8192]{0}', space=vmem, size = 0x2000, scoped, tag = 'input window, operand 0']
    #allocation3 [shape = 's32[2]{0}', space=sflag, size = 0x8, scoped, tag = 'scoped memory for tpu_custom_call.1']
    #allocation4 [shape = 's32[2]{0}', space=sflag, size = 0x8, scoped, tag = 'scoped memory for tpu_custom_call.1']
    #allocation5 [shape = 'u8[8192]{0}', space=vmem, size = 0x2000, scoped, tag = 'input window, operand 1']
    #allocation6 [shape = 's32[2]{0}', space=sflag, size = 0x8, scoped, tag = 'scoped memory for tpu_custom_call.1']
    #allocation7 [shape = 'u8[8192]{0}', space=vmem, size = 0x2000, scoped, tag = 'output window, operand 0']
    #allocation8 [shape = 'u8[8192]{0}', space=vmem, size = 0x2000, scoped, tag = 'output window, operand 1']
    #allocation9 [shape = 's32[2]{0}', space=sflag, size = 0x8, scoped, tag = 'scoped memory for tpu_custom_call.1']
    %9 = vsyncpa [#allocation3], 0
    %s10 = scalar_lea.sflag [#allocation3], 1
    %11 = vsyncpa %s10, 0
    %12 = vsyncpa [#allocation6], 0
    %s13 = scalar_lea.sflag [#allocation6], 1
    %14 = vsyncpa %s13, 0
    %15 = vsyncpa [#allocation4], 0
    %s16 = scalar_lea.sflag [#allocation4], 1
    %17 = vsyncpa %s16, 0
    %18 = vsyncpa [#allocation9], 0
    %s19 = scalar_lea.sflag [#allocation9], 1
    %20 = vsyncpa %s19, 0
    loop: start=0, step=1, limit=4
    $region2: #{tpu_custom_call.1} parent=1 // loop_pre_header
      _
    $region3: #{tpu_custom_call.1} parent=1 // loop_header
      %s22 = sphi 0, %s26
      %p23 = scmp.ge.s32.totalorder %s22, 4
      %s29 = sphi 0, %s41
      %s30 = sphi 0, %s37
      %s31 = sphi 0, %s29
      %s32 = sphi 0, %s30
      %s33 = sphi 0, %s31
      %s34 = sphi 0, %s32
      %s50 = sphi 0, %s52
      %s53 = sphi 0, %s50
      %s54 = sphi 0, %s53
      %s70 = sphi 0, %s54
      %s82 = sphi 0, %s84
      %s85 = sphi 0, %s82
      %s86 = sphi 0, %s85
      %s102 = sphi 0, %s86
      %s108 = sphi 0, %s110
      %s111 = sphi 0, %s108
      %s112 = sphi 0, %s111
      %s128 = sphi 0, %s112
      %s134 = sphi 0, %s136
      %s137 = sphi 0, %s134
      %s138 = sphi 0, %s137
      %s154 = sphi 0, %s138
    $region4: #{tpu_custom_call.1} parent=1 // loop_header_branch
      %25 = sbr.rel (%p23) target = $region8
    $region5: #{tpu_custom_call.1} parent=1 // loop_body
      %s27 = ssub.s32 %s22, 1
      %s28 = ssub.s32 %s22, 2
      %s35 = sadd.s32 1, %s30
      %p36 = scmp.ge.s32.totalorder %s35, 1
      %s37 = scalar_select %p36, 0, %s35
      %s38 = sadd.s32 1, %s29
      %s39 = scalar_select %p36, %s38, %s29
      %p40 = scmp.ge.s32.totalorder %s39, 2
      %s41 = scalar_select %p40, 0, %s39
      %s42 = sadd.s32 %s29, %s30
      %p43 = scmp.lt.s32.totalorder %s42, 1
      %s44 = scalar_select %p43, %s42, 1
      %s45 = sadd.s32 %s41, %s37
      %p46 = scmp.lt.s32.totalorder %s45, 1
      %s47 = scalar_select %p46, %s45, 1
      %s48 = ssub.s32 %s44, %s47
      %p49 = scmp.eq.s32.totalorder %s48, 0
      %s51 = sadd.s32 %s50, 1
      %s52 = scalar_select %p49, %s50, %s51
      %p55 = pneg %p49
      %p56 = scmp.eq.s32.totalorder %s22, 1
      %p57 = por %p55, %p56
      %p58 = scmp.ne.s32.totalorder %s50, %s53
      %p59 = scmp.eq.s32.totalorder %s22, 0
      %p60 = por %p58, %p59
      %p61 = scmp.ne.s32.totalorder %s50, %s53
      %p62 = scmp.eq.s32.totalorder %s27, 1
      %p63 = por %p61, %p62
      %p64 = scmp.ne.s32.totalorder %s53, %s54
      %p65 = scmp.eq.s32.totalorder %s27, 0
      %p66 = por %p64, %p65
      %p67 = scmp.ne.s32.totalorder %s53, %s54
      %p68 = scmp.eq.s32.totalorder %s28, 1
      %p69 = por %p67, %p68
      %p71 = scmp.ne.s32.totalorder %s54, %s70
      %p72 = scmp.eq.s32.totalorder %s28, 0
      %p73 = por %p71, %p72
      %s74 = sadd.s32 %s29, %s30
      %p75 = scmp.lt.s32.totalorder %s74, 1
      %s76 = scalar_select %p75, %s74, 1
      %s77 = sadd.s32 %s41, %s37
      %p78 = scmp.lt.s32.totalorder %s77, 1
      %s79 = scalar_select %p78, %s77, 1
      %s80 = ssub.s32 %s76, %s79
      %p81 = scmp.eq.s32.totalorder %s80, 0
      %s83 = sadd.s32 %s82, 1
      %s84 = scalar_select %p81, %s82, %s83
      %p87 = pneg %p81
      %p88 = scmp.eq.s32.totalorder %s22, 1
      %p89 = por %p87, %p88
      %p90 = scmp.ne.s32.totalorder %s82, %s85
      %p91 = scmp.eq.s32.totalorder %s22, 0
      %p92 = por %p90, %p91
      %p93 = scmp.ne.s32.totalorder %s82, %s85
      %p94 = scmp.eq.s32.totalorder %s27, 1
      %p95 = por %p93, %p94
      %p96 = scmp.ne.s32.totalorder %s85, %s86
      %p97 = scmp.eq.s32.totalorder %s27, 0
      %p98 = por %p96, %p97
      %p99 = scmp.ne.s32.totalorder %s85, %s86
      %p100 = scmp.eq.s32.totalorder %s28, 1
      %p101 = por %p99, %p100
      %p103 = scmp.ne.s32.totalorder %s86, %s102
      %p104 = scmp.eq.s32.totalorder %s28, 0
      %p105 = por %p103, %p104
      %s106 = ssub.s32 %s29, %s41
      %p107 = scmp.eq.s32.totalorder %s106, 0
      %s109 = sadd.s32 %s108, 1
      %s110 = scalar_select %p107, %s108, %s109
      %p113 = pneg %p107
      %p114 = scmp.eq.s32.totalorder %s22, 1
      %p115 = por %p113, %p114
      %p116 = scmp.ne.s32.totalorder %s108, %s111
      %p117 = scmp.eq.s32.totalorder %s22, 0
      %p118 = por %p116, %p117
      %p119 = scmp.ne.s32.totalorder %s108, %s111
      %p120 = scmp.eq.s32.totalorder %s27, 1
      %p121 = por %p119, %p120
      %p122 = scmp.ne.s32.totalorder %s111, %s112
      %p123 = scmp.eq.s32.totalorder %s27, 0
      %p124 = por %p122, %p123
      %p125 = scmp.ne.s32.totalorder %s111, %s112
      %p126 = scmp.eq.s32.totalorder %s28, 1
      %p127 = por %p125, %p126
      %p129 = scmp.ne.s32.totalorder %s112, %s128
      %p130 = scmp.eq.s32.totalorder %s28, 0
      %p131 = por %p129, %p130
      %s132 = ssub.s32 %s29, %s41
      %p133 = scmp.eq.s32.totalorder %s132, 0
      %s135 = sadd.s32 %s134, 1
      %s136 = scalar_select %p133, %s134, %s135
      %p139 = pneg %p133
      %p140 = scmp.eq.s32.totalorder %s22, 1
      %p141 = por %p139, %p140
      %p142 = scmp.ne.s32.totalorder %s134, %s137
      %p143 = scmp.eq.s32.totalorder %s22, 0
      %p144 = por %p142, %p143
      %p145 = scmp.ne.s32.totalorder %s134, %s137
      %p146 = scmp.eq.s32.totalorder %s27, 1
      %p147 = por %p145, %p146
      %p148 = scmp.ne.s32.totalorder %s137, %s138
      %p149 = scmp.eq.s32.totalorder %s27, 0
      %p150 = por %p148, %p149
      %p151 = scmp.ne.s32.totalorder %s137, %s138
      %p152 = scmp.eq.s32.totalorder %s28, 1
      %p153 = por %p151, %p152
      %p155 = scmp.ne.s32.totalorder %s138, %s154
      %p156 = scmp.eq.s32.totalorder %s28, 0
      %p157 = por %p155, %p156
      %p158 = scmp.le.s32.totalorder 1, %s22
      %p159 = scmp.lt.s32.totalorder %s22, 3
      %p160 = pnand %p158, %p159
      %p161 = pneg %p160
      // Predicated region
      $region9: #{tpu_custom_call.1} parent=5 // pred_check
        _
      $region10: #{tpu_custom_call.1} parent=5 // pred_check_branch
        %163 = sbr.rel (%p160) target = $region12
      $region11: #{tpu_custom_call.1} parent=5 // pred_region
        %s164 = ssub.s32 %s22, 1
      $region12: #{tpu_custom_call.1} parent=5 // pred_fallthru
        _
      %p165 = scmp.lt.s32.totalorder %s22, 2
      // Predicated region
      $region13: #{tpu_custom_call.1} parent=5 // pred_check
        %p166 = pneg %p165
      $region14: #{tpu_custom_call.1} parent=5 // pred_check_branch
        %168 = sbr.rel (%p166) target = $region16
      $region15: #{tpu_custom_call.1} parent=5 // pred_region
        // Predicated region
        $region17: #{tpu_custom_call.1} parent=15 // pred_check
          %p169 = pneg %p60
        $region18: #{tpu_custom_call.1} parent=15 // pred_check_branch
          %171 = sbr.rel (%p169) target = $region20
        $region19: #{tpu_custom_call.1} parent=15 // pred_region
          %s172 = sand.u32 %s50, 1
          %s173 = scalar_lea.sflag [#allocation3], %s172
          %s174 = sand.u32 %s50, 1
          %s175 = smul.addr %s174, 8
          %s176 = scalar_lea.vmem [#allocation2], %s175
          %s177 = sadd.s32 %s29, %s30
          %p178 = scmp.lt.s32.totalorder %s177, 1
          %s179 = scalar_select %p178, %s177, 1
          %s181 = ssub.s32 128, 128
          %182 = vsyncadd %s173, %s181
          %s183 = smul.addr %s179, 128
          %s184 = scalar_lea.hbm %s0, %s183
          %s186 = sshll.u32 %s176, 4
          %s187 = int_to_ptr.vmem [resolvable:$true] %s186
          %189 = dma.hbm_to_vmem [thread:$0]  %s184, 128, %s187, %s173
        $region20: #{tpu_custom_call.1} parent=15 // pred_fallthru
          _
        // Predicated region
        $region21: #{tpu_custom_call.1} parent=15 // pred_check
          %p190 = pneg %p92
        $region22: #{tpu_custom_call.1} parent=15 // pred_check_branch
          %192 = sbr.rel (%p190) target = $region24
        $region23: #{tpu_custom_call.1} parent=15 // pred_region
          %s193 = sand.u32 %s82, 1
          %s194 = scalar_lea.sflag [#allocation6], %s193
          %s195 = sand.u32 %s82, 1
          %s196 = smul.addr %s195, 8
          %s197 = scalar_lea.vmem [#allocation5], %s196
          %s198 = sadd.s32 %s29, %s30
          %p199 = scmp.lt.s32.totalorder %s198, 1
          %s200 = scalar_select %p199, %s198, 1
          %s202 = ssub.s32 128, 128
          %203 = vsyncadd %s194, %s202
          %s204 = smul.addr %s200, 128
          %s205 = scalar_lea.hbm %s1, %s204
          %s207 = sshll.u32 %s197, 4
          %s208 = int_to_ptr.vmem [resolvable:$true] %s207
          %210 = dma.hbm_to_vmem [thread:$0]  %s205, 128, %s208, %s194
        $region24: #{tpu_custom_call.1} parent=15 // pred_fallthru
          _
      $region16: #{tpu_custom_call.1} parent=5 // pred_fallthru
        _
      %p211 = scmp.le.s32.totalorder 1, %s22
      %p212 = scmp.lt.s32.totalorder %s22, 3
      %p213 = pnand %p211, %p212
      %p214 = pneg %p213
      // Predicated region
      $region25: #{tpu_custom_call.1} parent=5 // pred_check
        _
      $region26: #{tpu_custom_call.1} parent=5 // pred_check_branch
        %216 = sbr.rel (%p213) target = $region28
      $region27: #{tpu_custom_call.1} parent=5 // pred_region
        %s217 = ssub.s32 %s22, 1
        %s218 = sand.u32 %s53, 1
        %s219 = scalar_lea.sflag [#allocation3], %s218
        %s220 = sand.u32 %s53, 1
        %s221 = smul.addr %s220, 8
        %s222 = scalar_lea.vmem [#allocation2], %s221
        // Predicated region
        $region29: #{tpu_custom_call.1} parent=27 // pred_check
          %p223 = pneg %p66
        $region30: #{tpu_custom_call.1} parent=27 // pred_check_branch
          %225 = sbr.rel (%p223) target = $region32
        $region31: #{tpu_custom_call.1} parent=27 // pred_region
          %226 = dma.done %s219, 128
        $region32: #{tpu_custom_call.1} parent=27 // pred_fallthru
          _
        %s227 = sand.u32 %s85, 1
        %s228 = scalar_lea.sflag [#allocation6], %s227
        %s229 = sand.u32 %s85, 1
        %s230 = smul.addr %s229, 8
        %s231 = scalar_lea.vmem [#allocation5], %s230
        // Predicated region
        $region33: #{tpu_custom_call.1} parent=27 // pred_check
          %p232 = pneg %p98
        $region34: #{tpu_custom_call.1} parent=27 // pred_check_branch
          %234 = sbr.rel (%p232) target = $region36
        $region35: #{tpu_custom_call.1} parent=27 // pred_region
          %235 = dma.done %s228, 128
        $region36: #{tpu_custom_call.1} parent=27 // pred_fallthru
          _
        %s236 = sand.u32 %s53, 1
        %s237 = scalar_lea.sflag [#allocation3], %s236
        %s238 = sand.u32 %s53, 1
        %s239 = smul.addr %s238, 8
        %s240 = scalar_lea.vmem [#allocation2], %s239
        %p241 = pneg %p66
        %p242 = pneg %p63
        %s243 = sand.u32 %s85, 1
        %s244 = scalar_lea.sflag [#allocation6], %s243
        %s245 = sand.u32 %s85, 1
        %s246 = smul.addr %s245, 8
        %s247 = scalar_lea.vmem [#allocation5], %s246
        %p248 = pneg %p98
        %p249 = pneg %p95
        %p250 = pneg %p124
        %p251 = pneg %p121
        %s252 = sand.u32 %s111, 1
        %s253 = scalar_lea.sflag [#allocation4], %s252
        %s254 = sand.u32 %s111, 1
        %s255 = smul.addr %s254, 8
        %s256 = scalar_lea.vmem [#allocation7], %s255
        %p257 = pneg %p150
        %p258 = pneg %p147
        %s259 = sand.u32 %s137, 1
        %s260 = scalar_lea.sflag [#allocation9], %s259
        %s261 = sand.u32 %s137, 1
        %s262 = smul.addr %s261, 8
        %s263 = scalar_lea.vmem [#allocation8], %s262
        %s264 = sadd.s32 %s31, %s32
        %p265 = scmp.lt.s32.totalorder %s264, 1
        %s266 = scalar_select %p265, %s264, 1
        %s267 = sadd.s32 %s31, %s32
        %p268 = scmp.lt.s32.totalorder %s267, 1
        %s269 = scalar_select %p268, %s267, 1
        %p270 = scmp.eq.s32.totalorder %s32, 0
        // Predicated region
        $region37: #{tpu_custom_call.1} parent=27 // pred_check
          %p271 = pneg %p270
        $region38: #{tpu_custom_call.1} parent=27 // pred_check_branch
          %273 = sbr.rel (%p271) target = $region40
        $region39: #{tpu_custom_call.1} parent=27 // pred_region
          %274 = vst [vmem:[%s256] sm:$0xff] 0.0
          %275 = vst [vmem:[%s263] sm:$0xff] 0.0
        $region40: #{tpu_custom_call.1} parent=27 // pred_fallthru
          _
        %v276 = vld [vmem:[%s222] sm:$0xff]
        %v277 = vld [vmem:[%s231] sm:$0xff]
        %s278 = sadd.s32 %s31, %s32
        %s279 = smul.u32 %s278, 8
        %v280 = vlaneseq
        %v281 = vshrl.u32 %v280, 7
        %v282 = vstv %s279
        %v283 = vadd.s32 %v282, %v281
        %v284 = vlaneseq
        %v285 = vand.u32 %v284, 127
        %v286 = vmul.u32 %v283, 128
        %v287 = vadd.s32 %v286, %v285
        %vm288 = vcmp.lt.s32.totalorder %v287, 2048
        %v289 = vsub.f32 %v277, %v276
        %v290 = vand.u32 2147483647, %v289
        %vm291 = vcmp.gt.f32.partialorder %v290, 0.1
        %vm292 = vmand %vm291, %vm288
        %v293 = vadd.f32 %v276, 1e-06
        %v294 = vlog2.pop %v293
        %v295 = vmul.f32 %v294, 0.6931472
        %v296 = vmul.f32 %v277, %v295
        %v297 = vsel %vm292, %v296, 0.0
        %v298 = vsel %vm292, 1.0, 0.0
        %v299 = vld [vmem:[%s256] sm:$0xff]
        %v300 = vadd.f32 %v297, 0.0
        %v301 = vadd.f32 %v299, %v300
        %302 = vst [vmem:[%s256] sm:$0xff] %v301
        %v303 = vld [vmem:[%s263] sm:$0xff]
        %v304 = vadd.f32 %v298, 0.0
        %v305 = vadd.f32 %v303, %v304
        %306 = vst [vmem:[%s263] sm:$0xff] %v305
        %s307 = sand.u32 %s111, 1
        %s308 = scalar_lea.sflag [#allocation4], %s307
        %s309 = sand.u32 %s111, 1
        %s310 = smul.addr %s309, 8
        %s311 = scalar_lea.vmem [#allocation7], %s310
        %s312 = sand.u32 %s137, 1
        %s313 = scalar_lea.sflag [#allocation9], %s312
        %s314 = sand.u32 %s137, 1
        %s315 = smul.addr %s314, 8
        %s316 = scalar_lea.vmem [#allocation8], %s315
        // Predicated region
        $region41: #{tpu_custom_call.1} parent=27 // pred_check
          %p317 = pneg %p121
        $region42: #{tpu_custom_call.1} parent=27 // pred_check_branch
          %319 = sbr.rel (%p317) target = $region44
        $region43: #{tpu_custom_call.1} parent=27 // pred_region
          %s321 = ssub.s32 128, 128
          %322 = vsyncadd %s308, %s321
          %s323 = smul.addr %s31, 128
          %s324 = scalar_lea.hbm %s2, %s323
          %s326 = sshll.u32 %s311, 4
          %s327 = int_to_ptr.vmem [resolvable:$true] %s326
          %329 = dma.vmem_to_hbm [thread:$0]  %s327, 128, %s324, %s308
        $region44: #{tpu_custom_call.1} parent=27 // pred_fallthru
          _
        // Predicated region
        $region45: #{tpu_custom_call.1} parent=27 // pred_check
          %p330 = pneg %p147
        $region46: #{tpu_custom_call.1} parent=27 // pred_check_branch
          %332 = sbr.rel (%p330) target = $region48
        $region47: #{tpu_custom_call.1} parent=27 // pred_region
          %s334 = ssub.s32 128, 128
          %335 = vsyncadd %s313, %s334
          %s336 = smul.addr %s31, 128
          %s337 = scalar_lea.hbm %s3, %s336
          %s339 = sshll.u32 %s316, 4
          %s340 = int_to_ptr.vmem [resolvable:$true] %s339
          %342 = dma.vmem_to_hbm [thread:$0]  %s340, 128, %s337, %s313
        $region48: #{tpu_custom_call.1} parent=27 // pred_fallthru
          _
      $region28: #{tpu_custom_call.1} parent=5 // pred_fallthru
        _
      %p343 = scmp.le.s32.totalorder 2, %s22
      // Predicated region
      $region49: #{tpu_custom_call.1} parent=5 // pred_check
        %p344 = pneg %p343
      $region50: #{tpu_custom_call.1} parent=5 // pred_check_branch
        %346 = sbr.rel (%p344) target = $region52
      $region51: #{tpu_custom_call.1} parent=5 // pred_region
        %s347 = ssub.s32 %s22, 2
        // Predicated region
        $region53: #{tpu_custom_call.1} parent=51 // pred_check
          %p348 = pneg %p127
        $region54: #{tpu_custom_call.1} parent=51 // pred_check_branch
          %350 = sbr.rel (%p348) target = $region56
        $region55: #{tpu_custom_call.1} parent=51 // pred_region
          %s351 = sand.u32 %s112, 1
          %s352 = scalar_lea.sflag [#allocation4], %s351
          %s353 = sand.u32 %s112, 1
          %s354 = smul.addr %s353, 8
          %s355 = scalar_lea.vmem [#allocation7], %s354
          %356 = dma.done %s352, 128
        $region56: #{tpu_custom_call.1} parent=51 // pred_fallthru
          _
        // Predicated region
        $region57: #{tpu_custom_call.1} parent=51 // pred_check
          %p357 = pneg %p153
        $region58: #{tpu_custom_call.1} parent=51 // pred_check_branch
          %359 = sbr.rel (%p357) target = $region60
        $region59: #{tpu_custom_call.1} parent=51 // pred_region
          %s360 = sand.u32 %s138, 1
          %s361 = scalar_lea.sflag [#allocation9], %s360
          %s362 = sand.u32 %s138, 1
          %s363 = smul.addr %s362, 8
          %s364 = scalar_lea.vmem [#allocation8], %s363
          %365 = dma.done %s361, 128
        $region60: #{tpu_custom_call.1} parent=51 // pred_fallthru
          _
      $region52: #{tpu_custom_call.1} parent=5 // pred_fallthru
        _
    $region6: #{tpu_custom_call.1} parent=1 // loop_footer
      %s26 = sadd.s32 1, %s22
    $region7: #{tpu_custom_call.1} parent=1 // loop_footer_branch
      %21 = sbr.rel target = $region3
    $region8: #{tpu_custom_call.1} parent=1 // loop_exit
      _
    %366 = vsyncpa [#allocation3], 1
    %s367 = scalar_lea.sflag [#allocation3], 1
    %368 = vsyncpa %s367, 1
    %369 = vsyncpa [#allocation6], 1
    %s370 = scalar_lea.sflag [#allocation6], 1
    %371 = vsyncpa %s370, 1
    %372 = vsyncpa [#allocation4], 1
    %s373 = scalar_lea.sflag [#allocation4], 1
    %374 = vsyncpa %s373, 1
    %375 = vsyncpa [#allocation9], 1
    %s376 = scalar_lea.sflag [#allocation9], 1
    %377 = vsyncpa %s376, 1

</llo_original>
